<compile_context>
chip_gen: v5e
topology: v5e:2x2
jax: 0.10.0
libtpu: 0.0.40
codegen_flags: <defaults>
</compile_context>

<pallas_src>
import jax
import jax.numpy as jnp
from jax.experimental import pallas as pl
from jax.experimental.pallas import tpu as pltpu


def _round_up(x, m):
    return ((x + m - 1) // m) * m


def mlp_kernel(x_ref, w1_ref, b1_ref, w2_ref, b2_ref, o_ref):
    """One batch tile, transposed layout (batch on the lane axis).

    x_ref : (in_dim, tb)      bf16
    w1_ref: (hidden, in_dim)  bf16  (PyTorch-native nn.Linear layout)
    b1_ref: (hidden, 1)       f32
    w2_ref: (out, hidden)     bf16
    b2_ref: (out, 1)          f32
    o_ref : (out, tb)         f32
    """
    # h_T = relu(W1 @ x_T + b1) : (hidden, tb); bf16 MXU operands, f32 accum.
    h = jnp.dot(w1_ref[...], x_ref[...], preferred_element_type=jnp.float32)
    h = jnp.maximum(h + b1_ref[...], 0.0)

    # TODO(synk): dropout is identity in eval mode (training=False); PyTorch's
    # RNG-matched training-mode dropout is not reproduced here.

    # logits_T = W2 @ h_T + b2 : (out, tb); lane-dense MXU output width.
    logits = jnp.dot(w2_ref[...], h.astype(jnp.bfloat16),
                     preferred_element_type=jnp.float32)
    logits = logits + b2_ref[...]

    # Numerically stable log_softmax over the class axis (axis 0 == sublanes).
    # Sublane reduce (XLU) + exp/log (EUP); f32 epilogue; lane-dense store.
    m = jnp.max(logits, axis=0, keepdims=True)
    shifted = logits - m
    lse = jnp.log(jnp.sum(jnp.exp(shifted), axis=0, keepdims=True))
    o_ref[...] = (shifted - lse).astype(o_ref.dtype)


def mlp_forward(x, w1, b1, w2, b2, *, block_batch=2048, out_dtype=jnp.float32):
    """Forward pass of the PyTorch MLP module.

    x : [B, in_dim] f32
    w1: [hidden, in_dim], b1: [hidden]   (nn.Linear native layouts)
    w2: [out_dim, hidden], b2: [out_dim]
    Returns log_softmax(linear2(relu(linear1(x))), dim=1): [B, out_dim].
    """
    batch, in_dim = x.shape
    hidden_dim = w1.shape[0]
    out_dim = w2.shape[0]

    block_batch = max(512, _round_up(block_batch, 512))

    # --- pick the batch tile (lane axis after the transpose) --------------
    if batch < 2 * 512:
        # Small batch: single full-dim tile (always layout-legal, no padding).
        tb = batch
    elif batch <= block_batch:
        # Medium batch: at least 2 lane-dense tiles so the parallel grid can
        # shard across v7x's two TensorCores; tb multiple of 512 (aligned for
        # both 128- and 256-wide MXUs).
        tb = min(block_batch, _round_up(pl.cdiv(batch, 2), 512))
    else:
        tb = block_batch
    n_tiles = pl.cdiv(batch, tb)
    padded_batch = n_tiles * tb

    # --- layout plumbing: transpose + bf16 cast (+ pad) in one fused pass --
    # Batch on the lane axis makes x loads and output stores lane-dense; bf16
    # halves the dominant HBM->VMEM x stream.  Weights keep PyTorch layout.
    x_t = x.T.astype(jnp.bfloat16)                            # (in_dim, B)
    if padded_batch != batch:
        x_t = jnp.pad(x_t, ((0, 0), (0, padded_batch - batch)))

    w1_bf = w1.astype(jnp.bfloat16)                           # (hidden, in)
    w2_bf = w2.astype(jnp.bfloat16)                           # (out, hidden)
    b1_col = b1.reshape(hidden_dim, 1).astype(jnp.float32)    # (hidden, 1)
    b2_col = b2.reshape(out_dim, 1).astype(jnp.float32)       # (out, 1)

    flops = 2 * padded_batch * (in_dim * hidden_dim + hidden_dim * out_dim)
    bytes_accessed = (
        x_t.size * 2                                           # x_T (bf16)
        + padded_batch * out_dim * jnp.dtype(out_dtype).itemsize
        + w1_bf.size * 2 + w2_bf.size * 2
        + (hidden_dim + out_dim) * 4)

    out_t = pl.pallas_call(
        mlp_kernel,
        out_shape=jax.ShapeDtypeStruct((out_dim, padded_batch), out_dtype),
        grid=(n_tiles,),
        in_specs=[
            # Activations: one lane-dense batch tile per grid step (pipelined).
            pl.BlockSpec((in_dim, tb), lambda i: (0, i)),
            # Weights / biases: same block every step -> DMA'd once, resident.
            pl.BlockSpec((hidden_dim, in_dim), lambda i: (0, 0)),
            pl.BlockSpec((hidden_dim, 1), lambda i: (0, 0)),
            pl.BlockSpec((out_dim, hidden_dim), lambda i: (0, 0)),
            pl.BlockSpec((out_dim, 1), lambda i: (0, 0)),
        ],
        out_specs=pl.BlockSpec((out_dim, tb), lambda i: (0, i)),
        compiler_params=pltpu.CompilerParams(
            # Batch tiles are independent -> shard across TCs on v7x megacore.
            dimension_semantics=("parallel",)),
        cost_estimate=pl.CostEstimate(
            flops=int(flops),
            transcendentals=int(padded_batch * (out_dim + 1)),
            bytes_accessed=int(bytes_accessed)),
    )(x_t, w1_bf, b1_col, w2_bf, b2_col)

    # Un-transpose back to [B, out_dim] (layout plumbing) and drop padding.
    return out_t[:, :batch].T


if __name__ == "__main__":
    # Shapes consistent with the module: hidden_dim=32 (module constant),
    # small in/out dims and a small demo batch.
    in_dim, hidden_dim, out_dim = 16, 32, 8

    key = jax.random.PRNGKey(0)
    kx, kw1, kb1, kw2, kb2, kx2 = jax.random.split(key, 6)

    # Deterministic params in PyTorch nn.Linear native layout / init bounds.
    bound1 = 1.0 / (in_dim ** 0.5)
    w1 = jax.random.uniform(kw1, (hidden_dim, in_dim), jnp.float32, -bound1, bound1)
    b1 = jax.random.uniform(kb1, (hidden_dim,), jnp.float32, -bound1, bound1)
    bound2 = 1.0 / (hidden_dim ** 0.5)
    w2 = jax.random.uniform(kw2, (out_dim, hidden_dim), jnp.float32, -bound2, bound2)
    b2 = jax.random.uniform(kb2, (out_dim,), jnp.float32, -bound2, bound2)

    def ref_bf16(xv):
        xb = xv.astype(jnp.bfloat16)
        w1b = w1.astype(jnp.bfloat16)
        w2b = w2.astype(jnp.bfloat16)
        h = jnp.maximum(
            jnp.dot(xb, w1b.T, preferred_element_type=jnp.float32) + b1, 0.0)
        logits = jnp.dot(h.astype(jnp.bfloat16), w2b.T,
                         preferred_element_type=jnp.float32) + b2
        return jax.nn.log_softmax(logits, axis=1)

    def ref_f32(xv):
        h = jnp.maximum(xv @ w1.T + b1, 0.0)
        return jax.nn.log_softmax(h @ w2.T + b2, axis=1)

    # --- small demo batch --------------------------------------------------
    batch = 8
    x = jax.random.normal(kx, (batch, in_dim), dtype=jnp.float32)
    out = mlp_forward(x, w1, b1, w2, b2)
    jax.block_until_ready(out)
    assert out.shape == (batch, out_dim)
    assert jnp.allclose(out, ref_bf16(x), atol=1e-4, rtol=1e-4), \
        "bf16-matched ref mismatch (small batch)"
    assert jnp.allclose(out, ref_f32(x), atol=3e-2, rtol=3e-2), \
        "f32 ref mismatch (small batch)"

    # --- larger batch: exercises multi-tile grid + ragged-tile padding -----
    batch2 = 1056
    x2 = jax.random.normal(kx2, (batch2, in_dim), dtype=jnp.float32)
    out2 = mlp_forward(x2, w1, b1, w2, b2)
    jax.block_until_ready(out2)
    assert out2.shape == (batch2, out_dim)
    assert jnp.allclose(out2, ref_bf16(x2), atol=1e-4, rtol=1e-4), \
        "bf16-matched ref mismatch (tiled batch)"

    print("KERNEL_OK")
</pallas_src>

<mosaic_0001>
module attributes {stable_mosaic.version = 11 : i64} {
  func.func @mlp_kernel(%arg0: i32, %arg1: memref<16x8xbf16, #tpu.memory_space<vmem>>, %arg2: memref<32x16xbf16, #tpu.memory_space<vmem>>, %arg3: memref<32x1xf32, #tpu.memory_space<vmem>>, %arg4: memref<8x32xbf16, #tpu.memory_space<vmem>>, %arg5: memref<8x1xf32, #tpu.memory_space<vmem>>, %arg6: memref<8x8xf32, #tpu.memory_space<vmem>>) attributes {dimension_semantics = [#tpu.dimension_semantics<parallel>], iteration_bounds = array<i64: 1>, scalar_prefetch = 0 : i64, scratch_operands = 0 : i64, tpu.core_type = #tpu.core_type<tc>, window_params = [{transform_indices = @transform_0, window_bounds = array<i64: 16, 8>}, {pipeline_mode = #tpu.pipeline_mode<synchronous>, transform_indices = @transform_1, window_bounds = array<i64: 32, 16>}, {pipeline_mode = #tpu.pipeline_mode<synchronous>, transform_indices = @transform_2, window_bounds = array<i64: 32, 1>}, {pipeline_mode = #tpu.pipeline_mode<synchronous>, transform_indices = @transform_3, window_bounds = array<i64: 8, 32>}, {pipeline_mode = #tpu.pipeline_mode<synchronous>, transform_indices = @transform_4, window_bounds = array<i64: 8, 1>}, {transform_indices = @transform_5, window_bounds = array<i64: 8, 8>}]} {
    %c0 = arith.constant 0 : index
    %c0_0 = arith.constant 0 : index
    %0 = vector.load %arg2[%c0, %c0_0] : memref<32x16xbf16, #tpu.memory_space<vmem>>, vector<32x16xbf16>
    %c0_1 = arith.constant 0 : index
    %c0_2 = arith.constant 0 : index
    %1 = vector.load %arg1[%c0_1, %c0_2] : memref<16x8xbf16, #tpu.memory_space<vmem>>, vector<16x8xbf16>
    %cst = arith.constant dense<0.000000e+00> : vector<32x8xf32>
    %2 = tpu.matmul %0, %1, %cst {dimension_numbers = #tpu.dot_dimension_numbers<[1], [0], [0], [1], [0, 0, 1, 1], [], []>} : vector<32x16xbf16>, vector<16x8xbf16>, vector<32x8xf32> -> vector<32x8xf32>
    %c0_3 = arith.constant 0 : index
    %c0_4 = arith.constant 0 : index
    %3 = vector.load %arg3[%c0_3, %c0_4] : memref<32x1xf32, #tpu.memory_space<vmem>>, vector<32x1xf32>
    %4 = vector.broadcast %3 : vector<32x1xf32> to vector<32x8xf32>
    %5 = arith.addf %2, %4 : vector<32x8xf32>
    %cst_5 = arith.constant 0.000000e+00 : f32
    %6 = vector.broadcast %cst_5 : f32 to vector<32x8xf32>
    %7 = arith.maximumf %5, %6 : vector<32x8xf32>
    %c0_6 = arith.constant 0 : index
    %c0_7 = arith.constant 0 : index
    %8 = vector.load %arg4[%c0_6, %c0_7] : memref<8x32xbf16, #tpu.memory_space<vmem>>, vector<8x32xbf16>
    %9 = arith.truncf %7 : vector<32x8xf32> to vector<32x8xbf16>
    %cst_8 = arith.constant dense<0.000000e+00> : vector<8x8xf32>
    %10 = tpu.matmul %8, %9, %cst_8 {dimension_numbers = #tpu.dot_dimension_numbers<[1], [0], [0], [1], [0, 0, 1, 1], [], []>} : vector<8x32xbf16>, vector<32x8xbf16>, vector<8x8xf32> -> vector<8x8xf32>
    %c0_9 = arith.constant 0 : index
    %c0_10 = arith.constant 0 : index
    %11 = vector.load %arg5[%c0_9, %c0_10] : memref<8x1xf32, #tpu.memory_space<vmem>>, vector<8x1xf32>
    %12 = vector.broadcast %11 : vector<8x1xf32> to vector<8x8xf32>
    %13 = arith.addf %10, %12 : vector<8x8xf32>
    %cst_11 = arith.constant dense<0xFF800000> : vector<8xf32>
    %14 = vector.multi_reduction <maximumf>, %13, %cst_11 [0] : vector<8x8xf32> to vector<8xf32>
    %15 = vector.shape_cast %14 : vector<8xf32> to vector<1x8xf32>
    %16 = vector.broadcast %15 : vector<1x8xf32> to vector<8x8xf32>
    %17 = arith.subf %13, %16 : vector<8x8xf32>
    %18 = math.exp %17 : vector<8x8xf32>
    %cst_12 = arith.constant dense<0.000000e+00> : vector<8xf32>
    %19 = vector.multi_reduction <add>, %18, %cst_12 [0] : vector<8x8xf32> to vector<8xf32>
    %20 = vector.shape_cast %19 : vector<8xf32> to vector<1x8xf32>
    %21 = math.log %20 : vector<1x8xf32>
    %22 = vector.broadcast %21 : vector<1x8xf32> to vector<8x8xf32>
    %23 = arith.subf %17, %22 : vector<8x8xf32>
    %c0_13 = arith.constant 0 : index
    %c0_14 = arith.constant 0 : index
    %24 = vector.load %arg6[%c0_13, %c0_14] : memref<8x8xf32, #tpu.memory_space<vmem>>, vector<8x8xf32>
    tpu.vector_store %arg6[%c0_13, %c0_14], %23 {strides = array<i32>} : memref<8x8xf32, #tpu.memory_space<vmem>>, vector<8x8xf32>,
    return
  }
  func.func @transform_0(%arg0: i32) -> (i32, i32) {
    %c0_i32 = arith.constant 0 : i32
    %c0_i32_0 = arith.constant 0 : i32
    return %c0_i32, %arg0 : i32, i32
  }
  func.func @transform_1(%arg0: i32) -> (i32, i32) {
    %c0_i32 = arith.constant 0 : i32
    %c0_i32_0 = arith.constant 0 : i32
    %c0_i32_1 = arith.constant 0 : i32
    return %c0_i32, %c0_i32_0 : i32, i32
  }
  func.func @transform_2(%arg0: i32) -> (i32, i32) {
    %c0_i32 = arith.constant 0 : i32
    %c0_i32_0 = arith.constant 0 : i32
    %c0_i32_1 = arith.constant 0 : i32
    return %c0_i32, %c0_i32_0 : i32, i32
  }
  func.func @transform_3(%arg0: i32) -> (i32, i32) {
    %c0_i32 = arith.constant 0 : i32
    %c0_i32_0 = arith.constant 0 : i32
    %c0_i32_1 = arith.constant 0 : i32
    return %c0_i32, %c0_i32_0 : i32, i32
  }
  func.func @transform_4(%arg0: i32) -> (i32, i32) {
    %c0_i32 = arith.constant 0 : i32
    %c0_i32_0 = arith.constant 0 : i32
    %c0_i32_1 = arith.constant 0 : i32
    return %c0_i32, %c0_i32_0 : i32, i32
  }
  func.func @transform_5(%arg0: i32) -> (i32, i32) {
    %c0_i32 = arith.constant 0 : i32
    %c0_i32_0 = arith.constant 0 : i32
    return %c0_i32, %arg0 : i32, i32
  }
}

</mosaic_0001>

<llo_original>
// kernel: tpu_custom_call.1
$region0: #{tpu_custom_call.1}
  #allocation0 [shape = 'u32[]', space=smem, size = 0x4, offset = 0x4, fixed_abs, tag = 'smem constant byte address 0x4 - core index']
  #allocation1 [shape = 'u32[72,128]{1,0:T(1,128)}', space=vmem, size = 0x9000, scoped, tag = 'internal scratch']
  %s0 = inlined_call_operand.vmem [shape: bf16[16,8], index: 0, kind: input, shape index: {}]
  %s1 = inlined_call_operand.vmem [shape: bf16[32,16], index: 1, kind: input, shape index: {}]
  %s2 = inlined_call_operand.vmem [shape: f32[32,1], index: 2, kind: input, shape index: {}]
  %s3 = inlined_call_operand.vmem [shape: bf16[8,32], index: 3, kind: input, shape index: {}]
  %s4 = inlined_call_operand.vmem [shape: f32[8,1], index: 4, kind: input, shape index: {}]
  %s5 = inlined_call_operand.hbm [shape: f32[8,8], index: 5, kind: output, shape index: {}]
  %s6 = sld [smem:[#allocation0]]
  $region30: #{tpu_custom_call.1} parent=0
    _
  %s8 = ssub.s32 1, %s6
  %s9 = scalar_select 0, %s8, %s6
  $region1: #{tpu_custom_call.1} parent=0
    #allocation2 [shape = 'u8[4096]{0}', space=vmem, size = 0x1000, scoped, tag = 'output window, operand 0, single buffered']
    #allocation3 [shape = 's32[1]{0}', space=sflag, size = 0x4, scoped, tag = 'scoped memory for tpu_custom_call.1']
    %10 = vsyncpa [#allocation3], 0
    // Predicated region
    $region2: #{tpu_custom_call.1} parent=1 // pred_check
      _
    $region3: #{tpu_custom_call.1} parent=1 // pred_check_branch
      %12 = sbr.rel (0) target = $region5
    $region4: #{tpu_custom_call.1} parent=1 // pred_region
      _
    $region5: #{tpu_custom_call.1} parent=1 // pred_fallthru
      _
    // Predicated region
    $region6: #{tpu_custom_call.1} parent=1 // pred_check
      _
    $region7: #{tpu_custom_call.1} parent=1 // pred_check_branch
      %14 = sbr.rel (0) target = $region9
    $region8: #{tpu_custom_call.1} parent=1 // pred_region
      _
    $region9: #{tpu_custom_call.1} parent=1 // pred_fallthru
      _
    // Predicated region
    $region10: #{tpu_custom_call.1} parent=1 // pred_check
      _
    $region11: #{tpu_custom_call.1} parent=1 // pred_check_branch
      %16 = sbr.rel (0) target = $region13
    $region12: #{tpu_custom_call.1} parent=1 // pred_region
      _
    $region13: #{tpu_custom_call.1} parent=1 // pred_fallthru
      _
    // Predicated region
    $region14: #{tpu_custom_call.1} parent=1 // pred_check
      _
    $region15: #{tpu_custom_call.1} parent=1 // pred_check_branch
      %18 = sbr.rel (0) target = $region17
    $region16: #{tpu_custom_call.1} parent=1 // pred_region
      _
    $region17: #{tpu_custom_call.1} parent=1 // pred_fallthru
      _
    // Predicated region
    $region18: #{tpu_custom_call.1} parent=1 // pred_check
      _
    $region19: #{tpu_custom_call.1} parent=1 // pred_check_branch
      %20 = sbr.rel (0) target = $region21
    $region20: #{tpu_custom_call.1} parent=1 // pred_region
      _
    $region21: #{tpu_custom_call.1} parent=1 // pred_fallthru
      _
    %v22 = vld [vmem:[%s1] sm:$0xf]
    %v23 = vld [vmem:[%s1 + $0x4] sm:$0xf]
    %v24 = vld [vmem:[%s1 + $0x8] sm:$0xf]
    %v25 = vld [vmem:[%s1 + $0xc] sm:$0xf]
    %v26 = vld [vmem:[%s0] sm:$0xf]
    %v27 = vld [vmem:[%s0 + $0x4] sm:$0xf]
    %v28 = vld [vmem:[%s2] sm:$0xff]
    %v29 = vld [vmem:[%s2 + $0x8] sm:$0xff]
    %v30 = vld [vmem:[%s2 + $0x10] sm:$0xff]
    %v31 = vld [vmem:[%s2 + $0x18] sm:$0xff]
    %33 = vset.pattern.permute.xlu0 0
    %34 = vperm.xlu0 %33, %v28
    %v35 = vpop.permute.xlu0 %34
    %38 = vset.pattern.permute.xlu0 0
    %39 = vperm.xlu0 %38, %v29
    %v40 = vpop.permute.xlu0 %39
    %43 = vset.pattern.permute.xlu0 0
    %44 = vperm.xlu0 %43, %v30
    %v45 = vpop.permute.xlu0 %44
    %48 = vset.pattern.permute.xlu0 0
    %49 = vperm.xlu0 %48, %v31
    %v50 = vpop.permute.xlu0 %49
    %v56 = vunpack.c.l.b16 %v22
    %v57 = vunpack.c.l.b16 %v23
    %v58 = vunpack.c.l.b16 %v24
    %v59 = vunpack.c.l.b16 %v25
    %v60 = vpack.c.b16 %v57, %v56
    %v61 = vpack.c.b16 %v59, %v58
    %v64 = vunpack.c.l.b16 %v26
    %v65 = vunpack.c.l.b16 %v27
    %v66 = vpack.c.b16 %v65, %v64
    %vm68 = vcmask 130048
    %v70 = vsel %vm68, %v60, 0
    %v73 = vsel %vm68, %v61, 0
    %75 = vmatpush.bf16.msra.mxu0 0
    %76 = vmatpush.bf16.msra.mxu0 0
    %77 = vmatpush.bf16.msra.mxu0 0
    %78 = vmatpush.bf16.msra.mxu0 0
    %79 = vmatpush.bf16.msra.mxu0 0
    %80 = vmatpush.bf16.msra.mxu0 0
    %81 = vmatpush.bf16.msra.mxu0 0
    %82 = vmatpush.bf16.msra.mxu0 %v66
    %83 = vmatmul.bf16.gmra.mxu0 %v70
    %v84 = vpop.f32.mrf.mxu0
    %v85 = vadd.f32 %v35, %v84
    %v86 = vpop.f32.mrf.mxu0
    %v87 = vadd.f32 %v40, %v86
    %88 = vmatmul.bf16.gmra.mxu0 %v73
    %v89 = vpop.f32.mrf.mxu0
    %v90 = vadd.f32 %v45, %v89
    %v91 = vpop.f32.mrf.mxu0
    %v92 = vadd.f32 %v50, %v91
    %93 = vdwg.mxu0
    %v94 = vmax.f32 %v85, 0.0
    %v95 = vmax.f32 %v87, 0.0
    %v96 = vmax.f32 %v90, 0.0
    %v97 = vmax.f32 %v92, 0.0
    %v98 = vld [vmem:[%s3] sm:$0xf]
    %v99 = vpack.c.bf16 %v95, %v94
    %v100 = vpack.c.bf16 %v97, %v96
    %v101 = vld [vmem:[%s4] sm:$0xff]
    %103 = vset.pattern.permute.xlu0 0
    %104 = vperm.xlu0 %103, %v101
    %v105 = vpop.permute.xlu0 %104
    %vm107 = vcmask 261120
    %v109 = vsel %vm107, %v98, 0
    %111 = vmatpush.bf16.msra.mxu0 0
    %112 = vmatpush.bf16.msra.mxu0 0
    %113 = vmatpush.bf16.msra.mxu0 0
    %114 = vmatpush.bf16.msra.mxu0 0
    %115 = vmatpush.bf16.msra.mxu0 0
    %116 = vmatpush.bf16.msra.mxu0 0
    %117 = vmatpush.bf16.msra.mxu0 %v100
    %118 = vmatpush.bf16.msra.mxu0 %v99
    %119 = vmatmul.bf16.gmra.mxu0 %v109
    %v120 = vpop.f32.mrf.mxu0
    %v121 = vadd.f32 %v105, %v120
    %v122 = vpop.f32.mrf.mxu0
    %123 = vdwg.mxu0
    %vm124 = vcmask 64512
    %v125 = vsel %vm124, %v121, -inf
    %v126 = vrot.slane %v125, 4
    %v127 = vmax.f32 %v125, %v126
    %v128 = vrot.slane %v127, 2
    %v129 = vmax.f32 %v127, %v128
    %v130 = vrot.slane %v129, 1
    %v131 = vmax.f32 %v129, %v130
    %v132 = vsub.f32 %v121, %v131
    %v133 = vmul.f32 %v132, 1.442695
    %v134 = vpow.pop %v133
    %v135 = vsel %vm124, %v134, 0.0
    %v136 = vrot.slane %v135, 4
    %v137 = vadd.f32 %v135, %v136
    %v138 = vrot.slane %v137, 2
    %v139 = vadd.f32 %v137, %v138
    %v140 = vrot.slane %v139, 1
    %v141 = vadd.f32 %v139, %v140
    %v142 = vlog2.pop %v141
    %v143 = vmul.f32 %v142, 0.6931472
    %v144 = vsub.f32 %v132, %v143
    %145 = vst.msk [vmem:[#allocation2] sm:$0xff] %vm124, %v144
    // Predicated region
    $region22: #{tpu_custom_call.1} parent=1 // pred_check
      _
    $region23: #{tpu_custom_call.1} parent=1 // pred_check_branch
      %147 = sbr.rel (0) target = $region25
    $region24: #{tpu_custom_call.1} parent=1 // pred_region
      %149 = vsyncadd [#allocation3], 0
      %s151 = sshll.u32 [#allocation2], 4
      %s152 = int_to_ptr.vmem [resolvable:$true] %s151
      %s153 = sshll.u32 %s5, 4
      %s154 = int_to_ptr.hbm [resolvable:$true] %s153
      %156 = dma.vmem_to_hbm [thread:$0]  %s152, 128, %s154, [#allocation3]
    $region25: #{tpu_custom_call.1} parent=1 // pred_fallthru
      _
    // Predicated region
    $region26: #{tpu_custom_call.1} parent=1 // pred_check
      _
    $region27: #{tpu_custom_call.1} parent=1 // pred_check_branch
      %158 = sbr.rel (0) target = $region29
    $region28: #{tpu_custom_call.1} parent=1 // pred_region
      %160 = dma.done [#allocation3], 128
    $region29: #{tpu_custom_call.1} parent=1 // pred_fallthru
      _
    %161 = vsyncpa [#allocation3], 1

</llo_original>
